<compile_context>
chip_gen: v5e
topology: v5e:2x2
jax: 0.10.0
libtpu: 0.0.40
codegen_flags: <defaults>
</compile_context>

<pallas_src>
import jax
import jax.numpy as jnp
from jax.experimental import pallas as pl
from jax.experimental.pallas import tpu as pltpu

_EPS = 1e-5


def _cdiv(a, b):
    return (a + b - 1) // b


def _round_up(x, m):
    return ((x + m - 1) // m) * m


def _vmem_budget():
    """(tile_vmem_budget, vmem_limit_bytes), generation aware.

    v5e/v6e: 128 MiB VMEM per TC -> larger tiles / fewer grid steps.
    v7x:     64 MiB  -> conservative sizing.  Falls back to conservative
    numbers if the hardware query is unavailable.
    """
    try:
        cap = pltpu.get_tpu_info().vmem_capacity_bytes
    except Exception:
        cap = 64 * 1024 * 1024
    if cap >= 100 * 1024 * 1024:          # v5e / v6e
        return 48 * 1024 * 1024, 96 * 1024 * 1024
    return 24 * 1024 * 1024, 48 * 1024 * 1024   # v7x / unknown


def _pick_tile(n_rows, width, itemsize, sub, budget, cap=2048):
    """Row-tile size: sublane aligned, fits the VMEM budget (double-buffered
    in+out tiles in the I/O dtype plus ~4 live f32 temporaries), and capped so
    the grid has >= ~4 steps when possible (v7x megacore + pipelining).  If
    the tile would cover all rows it is set to exactly n_rows so the block
    equals the full array dim (exempt from the sublane-alignment rule)."""
    per_row = width * (4 * itemsize + 4 * 4)
    t = max(sub, (budget // max(per_row, 1)) // sub * sub)
    t = min(t, cap)
    t = min(t, max(sub, _round_up(_cdiv(n_rows, 4), sub)))
    if t >= n_rows:
        t = n_rows
    return max(t, 1)


def _ln_rows_kernel(x_ref, w_ref, b_ref, o_ref):
    # Rows on sublanes, hidden (H >= 128, or small-H fallback) on lanes.
    # x_ref/o_ref: (TR, H); w_ref/b_ref: (1, H).  Single-pass stats.
    x = x_ref[...].astype(jnp.float32)
    mean = jnp.mean(x, axis=-1, keepdims=True)
    msq = jnp.mean(x * x, axis=-1, keepdims=True)
    var = jnp.maximum(msq - mean * mean, 0.0)
    inv = jax.lax.rsqrt(var + _EPS)                 # EUP slot, effectively free
    w = w_ref[...].astype(jnp.float32)
    b = b_ref[...].astype(jnp.float32)
    o_ref[...] = ((x - mean) * inv * w + b).astype(o_ref.dtype)


def _ln_packed_kernel(x_ref, m_ref, w_ref, b_ref, o_ref):
    # Small H packed G = 128//H rows per 128-lane vreg row (zero-copy reshape
    # in the wrapper).  x_ref/o_ref: (TP, 128); m_ref: (128, 128) block-diag
    # ones/H; w_ref/b_ref: (1, 128) tiled weight/bias.  The matmuls compute
    # per-segment stats AND broadcast them back across each segment; MXU is
    # otherwise idle in LayerNorm.
    x = x_ref[...].astype(jnp.float32)
    m = m_ref[...]
    mean = jnp.dot(x, m, preferred_element_type=jnp.float32,
                   precision=jax.lax.Precision.HIGHEST)
    xc = x - mean
    var = jnp.dot(xc * xc, m, preferred_element_type=jnp.float32,
                  precision=jax.lax.Precision.HIGHEST)
    inv = jax.lax.rsqrt(var + _EPS)
    w = w_ref[...].astype(jnp.float32)
    b = b_ref[...].astype(jnp.float32)
    o_ref[...] = (xc * inv * w + b).astype(o_ref.dtype)


def layer_norm_pallas(x, weight, bias=None):
    """LayerNorm over the last dim of x (matches F.layer_norm, eps=1e-5).

    x: (..., H); weight: (H,); bias: (H,) or None.
    """
    orig_shape = x.shape
    H = orig_shape[-1]
    rows = 1
    for d in orig_shape[:-1]:
        rows *= int(d)
    if bias is None:
        bias = jnp.zeros((H,), weight.dtype)

    x2 = x.reshape(rows, H)
    itemsize = jnp.dtype(x.dtype).itemsize
    sub = max(8, 32 // itemsize)          # 8 (f32) / 16 (bf16) / 32 (int8)
    budget, vmem_limit = _vmem_budget()
    compiler_params = pltpu.CompilerParams(
        dimension_semantics=("parallel",),
        vmem_limit_bytes=vmem_limit,
    )

    if H < 128 and 128 % H == 0:
        # Lane-dense packed path: (rows, H) -> (rows/G, 128), no transposes.
        G = 128 // H
        pad = (-rows) % G
        x_src = x2
        if pad:
            # TODO(synk): rows not divisible by G falls back to one small pad
            # copy; the common aligned case stays zero-copy.
            x_src = jnp.pad(x2, ((0, pad), (0, 0)))
        prows = (rows + pad) // G
        xp = x_src.reshape(prows, 128)     # zero-copy reshape when pad == 0
        wp = jnp.tile(weight.astype(jnp.float32), G).reshape(1, 128)
        bp = jnp.tile(bias.astype(jnp.float32), G).reshape(1, 128)
        seg = jnp.arange(128) // H
        mdiag = jnp.where(seg[:, None] == seg[None, :],
                          jnp.float32(1.0 / H), jnp.float32(0.0))
        tp = _pick_tile(prows, 128, itemsize, sub, budget)
        out = pl.pallas_call(
            _ln_packed_kernel,
            out_shape=jax.ShapeDtypeStruct((prows, 128), x.dtype),
            grid_spec=pltpu.PrefetchScalarGridSpec(
                num_scalar_prefetch=0,
                grid=(_cdiv(prows, tp),),
                in_specs=[
                    pl.BlockSpec((tp, 128), lambda i: (i, 0)),
                    pl.BlockSpec((128, 128), lambda i: (0, 0)),
                    pl.BlockSpec((1, 128), lambda i: (0, 0)),
                    pl.BlockSpec((1, 128), lambda i: (0, 0)),
                ],
                out_specs=pl.BlockSpec((tp, 128), lambda i: (i, 0)),
            ),
            compiler_params=compiler_params,
        )(xp, mdiag, wp, bp)
        out = out.reshape(prows * G, H)
        if pad:
            out = out[:rows]
    else:
        # Hidden already lane-dense (H >= 128), or small H that doesn't divide
        # 128 (correct fallback).  No wrapper pad: ragged final block is
        # handled by Pallas.
        tr = _pick_tile(rows, H, itemsize, sub, budget)
        w2 = weight.reshape(1, H)
        b2 = bias.reshape(1, H)
        out = pl.pallas_call(
            _ln_rows_kernel,
            out_shape=jax.ShapeDtypeStruct((rows, H), x.dtype),
            grid_spec=pltpu.PrefetchScalarGridSpec(
                num_scalar_prefetch=0,
                grid=(_cdiv(rows, tr),),
                in_specs=[
                    pl.BlockSpec((tr, H), lambda i: (i, 0)),
                    pl.BlockSpec((1, H), lambda i: (0, 0)),
                    pl.BlockSpec((1, H), lambda i: (0, 0)),
                ],
                out_specs=pl.BlockSpec((tr, H), lambda i: (i, 0)),
            ),
            compiler_params=compiler_params,
        )(x2, w2, b2)

    return out.reshape(orig_shape)


def layer_norm_ref(x, weight, bias, eps=1e-5):
    xf = x.astype(jnp.float32)
    mean = jnp.mean(xf, axis=-1, keepdims=True)
    var = jnp.mean((xf - mean) ** 2, axis=-1, keepdims=True)
    y = (xf - mean) * jax.lax.rsqrt(var + eps)
    return (y * weight + bias).astype(x.dtype)


if __name__ == "__main__":
    key = jax.random.PRNGKey(0)
    batch, seq, hidden = 2, 8, 32   # LayerNorm(ndim=32)

    kx, kw, kb = jax.random.split(key, 3)
    x = jax.random.normal(kx, (batch, seq, hidden), dtype=jnp.float32)

    # ones/zeros init (as in nn.Parameter) perturbed so weight/bias matter.
    weight = jnp.ones((hidden,), jnp.float32) + 0.1 * jax.random.normal(kw, (hidden,))
    bias = jnp.zeros((hidden,), jnp.float32) + 0.1 * jax.random.normal(kb, (hidden,))

    out = jax.block_until_ready(layer_norm_pallas(x, weight, bias))
    ref = layer_norm_ref(x, weight, bias)
    assert out.shape == x.shape
    assert jnp.allclose(out, ref, atol=1e-5, rtol=1e-5), "mismatch (packed small-H path)"

    # Also exercise the lane-dense rows path (H >= 128) at a tiny size.
    hidden2 = 128
    kx2, kw2, kb2 = jax.random.split(jax.random.PRNGKey(1), 3)
    x2 = jax.random.normal(kx2, (batch, seq, hidden2), dtype=jnp.float32)
    w2 = jnp.ones((hidden2,), jnp.float32) + 0.1 * jax.random.normal(kw2, (hidden2,))
    b2 = jnp.zeros((hidden2,), jnp.float32) + 0.1 * jax.random.normal(kb2, (hidden2,))
    out2 = jax.block_until_ready(layer_norm_pallas(x2, w2, b2))
    ref2 = layer_norm_ref(x2, w2, b2)
    assert jnp.allclose(out2, ref2, atol=1e-5, rtol=1e-5), "mismatch (rows path)"

    print("KERNEL_OK")
</pallas_src>

<mosaic_0001>
module attributes {stable_mosaic.version = 11 : i64} {
  func.func @_ln_packed_kernel(%arg0: i32, %arg1: memref<4x128xf32, #tpu.memory_space<vmem>>, %arg2: memref<128x128xf32, #tpu.memory_space<vmem>>, %arg3: memref<1x128xf32, #tpu.memory_space<vmem>>, %arg4: memref<1x128xf32, #tpu.memory_space<vmem>>, %arg5: memref<4x128xf32, #tpu.memory_space<vmem>>) attributes {dimension_semantics = [#tpu.dimension_semantics<parallel>], iteration_bounds = array<i64: 1>, scalar_prefetch = 0 : i64, scratch_operands = 0 : i64, tpu.core_type = #tpu.core_type<tc>, window_params = [{transform_indices = @transform_0, window_bounds = array<i64: 4, 128>}, {pipeline_mode = #tpu.pipeline_mode<synchronous>, transform_indices = @transform_1, window_bounds = array<i64: 128, 128>}, {pipeline_mode = #tpu.pipeline_mode<synchronous>, transform_indices = @transform_2, window_bounds = array<i64: 1, 128>}, {pipeline_mode = #tpu.pipeline_mode<synchronous>, transform_indices = @transform_3, window_bounds = array<i64: 1, 128>}, {transform_indices = @transform_4, window_bounds = array<i64: 4, 128>}]} {
    %c0 = arith.constant 0 : index
    %c0_0 = arith.constant 0 : index
    %0 = vector.load %arg1[%c0, %c0_0] : memref<4x128xf32, #tpu.memory_space<vmem>>, vector<4x128xf32>
    %c0_1 = arith.constant 0 : index
    %c0_2 = arith.constant 0 : index
    %1 = vector.load %arg2[%c0_1, %c0_2] : memref<128x128xf32, #tpu.memory_space<vmem>>, vector<128x128xf32>
    %cst = arith.constant dense<0.000000e+00> : vector<4x128xf32>
    %2 = tpu.matmul %0, %1, %cst {dimension_numbers = #tpu.dot_dimension_numbers<[1], [0], [0], [1], [0, 0, 1, 1], [], []>, precision = #tpu.contract_precision<fp32>} : vector<4x128xf32>, vector<128x128xf32>, vector<4x128xf32> -> vector<4x128xf32>
    %3 = arith.subf %0, %2 : vector<4x128xf32>
    %4 = arith.mulf %3, %3 : vector<4x128xf32>
    %cst_3 = arith.constant dense<0.000000e+00> : vector<4x128xf32>
    %5 = tpu.matmul %4, %1, %cst_3 {dimension_numbers = #tpu.dot_dimension_numbers<[1], [0], [0], [1], [0, 0, 1, 1], [], []>, precision = #tpu.contract_precision<fp32>} : vector<4x128xf32>, vector<128x128xf32>, vector<4x128xf32> -> vector<4x128xf32>
    %cst_4 = arith.constant 9.99999974E-6 : f32
    %6 = vector.broadcast %cst_4 : f32 to vector<4x128xf32>
    %7 = arith.addf %5, %6 : vector<4x128xf32>
    %8 = math.rsqrt %7 : vector<4x128xf32>
    %c0_5 = arith.constant 0 : index
    %c0_6 = arith.constant 0 : index
    %9 = vector.load %arg3[%c0_5, %c0_6] : memref<1x128xf32, #tpu.memory_space<vmem>>, vector<1x128xf32>
    %c0_7 = arith.constant 0 : index
    %c0_8 = arith.constant 0 : index
    %10 = vector.load %arg4[%c0_7, %c0_8] : memref<1x128xf32, #tpu.memory_space<vmem>>, vector<1x128xf32>
    %11 = arith.mulf %3, %8 : vector<4x128xf32>
    %12 = vector.broadcast %9 : vector<1x128xf32> to vector<4x128xf32>
    %13 = arith.mulf %11, %12 : vector<4x128xf32>
    %14 = vector.broadcast %10 : vector<1x128xf32> to vector<4x128xf32>
    %15 = arith.addf %13, %14 : vector<4x128xf32>
    %c0_9 = arith.constant 0 : index
    %c0_10 = arith.constant 0 : index
    %16 = vector.load %arg5[%c0_9, %c0_10] : memref<4x128xf32, #tpu.memory_space<vmem>>, vector<4x128xf32>
    tpu.vector_store %arg5[%c0_9, %c0_10], %15 {strides = array<i32>} : memref<4x128xf32, #tpu.memory_space<vmem>>, vector<4x128xf32>,
    return
  }
  func.func @transform_0(%arg0: i32) -> (i32, i32) {
    %c0_i32 = arith.constant 0 : i32
    %c0_i32_0 = arith.constant 0 : i32
    return %arg0, %c0_i32 : i32, i32
  }
  func.func @transform_1(%arg0: i32) -> (i32, i32) {
    %c0_i32 = arith.constant 0 : i32
    %c0_i32_0 = arith.constant 0 : i32
    %c0_i32_1 = arith.constant 0 : i32
    return %c0_i32, %c0_i32_0 : i32, i32
  }
  func.func @transform_2(%arg0: i32) -> (i32, i32) {
    %c0_i32 = arith.constant 0 : i32
    %c0_i32_0 = arith.constant 0 : i32
    %c0_i32_1 = arith.constant 0 : i32
    return %c0_i32, %c0_i32_0 : i32, i32
  }
  func.func @transform_3(%arg0: i32) -> (i32, i32) {
    %c0_i32 = arith.constant 0 : i32
    %c0_i32_0 = arith.constant 0 : i32
    %c0_i32_1 = arith.constant 0 : i32
    return %c0_i32, %c0_i32_0 : i32, i32
  }
  func.func @transform_4(%arg0: i32) -> (i32, i32) {
    %c0_i32 = arith.constant 0 : i32
    %c0_i32_0 = arith.constant 0 : i32
    return %arg0, %c0_i32 : i32, i32
  }
}

</mosaic_0001>

<llo_original>
// kernel: tpu_custom_call.1
$region0: #{tpu_custom_call.1}
  #allocation0 [shape = 'u32[]', space=smem, size = 0x4, offset = 0x4, fixed_abs, tag = 'smem constant byte address 0x4 - core index']
  #allocation1 [shape = 'u32[72,128]{1,0:T(1,128)}', space=vmem, size = 0x9000, scoped, tag = 'internal scratch']
  %s0 = inlined_call_operand.hbm [shape: f32[4,128], index: 0, kind: input, shape index: {}]
  %s1 = inlined_call_operand.hbm [shape: f32[128,128], index: 1, kind: input, shape index: {}]
  %s2 = inlined_call_operand.vmem [shape: f32[1,128], index: 2, kind: input, shape index: {}]
  %s3 = inlined_call_operand.vmem [shape: f32[1,128], index: 3, kind: input, shape index: {}]
  %s4 = inlined_call_operand.hbm [shape: f32[4,128], index: 4, kind: output, shape index: {}]
  %s5 = sld [smem:[#allocation0]]
  $region34: #{tpu_custom_call.1} parent=0
    _
  %s7 = ssub.s32 1, %s5
  %s8 = scalar_select 0, %s7, %s5
  $region1: #{tpu_custom_call.1} parent=0
    #allocation2 [shape = 'u8[2048]{0}', space=vmem, size = 0x800, scoped, tag = 'input window, operand 0, single buffered']
    #allocation3 [shape = 's32[1]{0}', space=sflag, size = 0x4, scoped, tag = 'scoped memory for tpu_custom_call.1']
    #allocation4 [shape = 's32[1]{0}', space=sflag, size = 0x4, scoped, tag = 'scoped memory for tpu_custom_call.1']
    #allocation5 [shape = 'u8[65536]{0}', space=vmem, size = 0x10000, scoped, tag = 'input window, operand 1, single buffered']
    #allocation6 [shape = 's32[1]{0}', space=sflag, size = 0x4, scoped, tag = 'scoped memory for tpu_custom_call.1']
    #allocation7 [shape = 'u8[2048]{0}', space=vmem, size = 0x800, scoped, tag = 'output window, operand 0, single buffered']
    %9 = vsyncpa [#allocation3], 0
    %10 = vsyncpa [#allocation6], 0
    %11 = vsyncpa [#allocation4], 0
    // Predicated region
    $region2: #{tpu_custom_call.1} parent=1 // pred_check
      _
    $region3: #{tpu_custom_call.1} parent=1 // pred_check_branch
      %13 = sbr.rel (0) target = $region5
    $region4: #{tpu_custom_call.1} parent=1 // pred_region
      %15 = vsyncadd [#allocation3], 0
      %s17 = sshll.u32 %s0, 4
      %s18 = int_to_ptr.hbm [resolvable:$true] %s17
      %s19 = sshll.u32 [#allocation2], 4
      %s20 = int_to_ptr.vmem [resolvable:$true] %s19
      %22 = dma.hbm_to_vmem [thread:$0]  %s18, 64, %s20, [#allocation3]
    $region5: #{tpu_custom_call.1} parent=1 // pred_fallthru
      _
    // Predicated region
    $region6: #{tpu_custom_call.1} parent=1 // pred_check
      _
    $region7: #{tpu_custom_call.1} parent=1 // pred_check_branch
      %24 = sbr.rel (0) target = $region9
    $region8: #{tpu_custom_call.1} parent=1 // pred_region
      %26 = vsyncadd [#allocation6], 0
      %s27 = sshll.u32 %s1, 4
      %s28 = int_to_ptr.hbm [resolvable:$true] %s27
      %s29 = sshll.u32 [#allocation5], 4
      %s30 = int_to_ptr.vmem [resolvable:$true] %s29
      %35 = dma.hbm_to_vmem [thread:$0]  %s28, 2048, %s30, [#allocation6], 128, 128, 8
    $region9: #{tpu_custom_call.1} parent=1 // pred_fallthru
      _
    // Predicated region
    $region10: #{tpu_custom_call.1} parent=1 // pred_check
      _
    $region11: #{tpu_custom_call.1} parent=1 // pred_check_branch
      %37 = sbr.rel (0) target = $region13
    $region12: #{tpu_custom_call.1} parent=1 // pred_region
      _
    $region13: #{tpu_custom_call.1} parent=1 // pred_fallthru
      _
    // Predicated region
    $region14: #{tpu_custom_call.1} parent=1 // pred_check
      _
    $region15: #{tpu_custom_call.1} parent=1 // pred_check_branch
      %39 = sbr.rel (0) target = $region17
    $region16: #{tpu_custom_call.1} parent=1 // pred_region
      _
    $region17: #{tpu_custom_call.1} parent=1 // pred_fallthru
      _
    // Predicated region
    $region18: #{tpu_custom_call.1} parent=1 // pred_check
      _
    $region19: #{tpu_custom_call.1} parent=1 // pred_check_branch
      %41 = sbr.rel (0) target = $region21
    $region20: #{tpu_custom_call.1} parent=1 // pred_region
      %43 = dma.done [#allocation3], 64
    $region21: #{tpu_custom_call.1} parent=1 // pred_fallthru
      _
    // Predicated region
    $region22: #{tpu_custom_call.1} parent=1 // pred_check
      _
    $region23: #{tpu_custom_call.1} parent=1 // pred_check_branch
      %45 = sbr.rel (0) target = $region25
    $region24: #{tpu_custom_call.1} parent=1 // pred_region
      %47 = dma.done [#allocation6], 2048
    $region25: #{tpu_custom_call.1} parent=1 // pred_fallthru
      _
    %v48 = vld [vmem:[#allocation2] sm:$0xf]
    %v49 = vld [vmem:[#allocation5] sm:$0xff]
    %v50 = vld [vmem:[#allocation5 + $0x8] sm:$0xff]
    %v51 = vld [vmem:[#allocation5 + $0x10] sm:$0xff]
    %v52 = vld [vmem:[#allocation5 + $0x18] sm:$0xff]
    %v53 = vld [vmem:[#allocation5 + $0x20] sm:$0xff]
    %v54 = vld [vmem:[#allocation5 + $0x28] sm:$0xff]
    %v55 = vld [vmem:[#allocation5 + $0x30] sm:$0xff]
    %v56 = vld [vmem:[#allocation5 + $0x38] sm:$0xff]
    %v57 = vld [vmem:[#allocation5 + $0x40] sm:$0xff]
    %v58 = vld [vmem:[#allocation5 + $0x48] sm:$0xff]
    %v59 = vld [vmem:[#allocation5 + $0x50] sm:$0xff]
    %v60 = vld [vmem:[#allocation5 + $0x58] sm:$0xff]
    %v61 = vld [vmem:[#allocation5 + $0x60] sm:$0xff]
    %v62 = vld [vmem:[#allocation5 + $0x68] sm:$0xff]
    %v63 = vld [vmem:[#allocation5 + $0x70] sm:$0xff]
    %v64 = vld [vmem:[#allocation5 + $0x78] sm:$0xff]
    %v65 = vand.u32 %v64, 4294901760
    %66 = vmatpush.msra.mxu0 %v65
    %v67 = vand.u32 %v63, 4294901760
    %68 = vmatpush.msra.mxu0 %v67
    %v69 = vand.u32 %v62, 4294901760
    %70 = vmatpush.msra.mxu0 %v69
    %v71 = vand.u32 %v61, 4294901760
    %72 = vmatpush.msra.mxu0 %v71
    %v73 = vand.u32 %v60, 4294901760
    %74 = vmatpush.msra.mxu0 %v73
    %v75 = vand.u32 %v59, 4294901760
    %76 = vmatpush.msra.mxu0 %v75
    %v77 = vand.u32 %v58, 4294901760
    %78 = vmatpush.msra.mxu0 %v77
    %v79 = vand.u32 %v57, 4294901760
    %80 = vmatpush.msra.mxu0 %v79
    %v81 = vand.u32 %v56, 4294901760
    %82 = vmatpush.msra.mxu0 %v81
    %v83 = vand.u32 %v55, 4294901760
    %84 = vmatpush.msra.mxu0 %v83
    %v85 = vand.u32 %v54, 4294901760
    %86 = vmatpush.msra.mxu0 %v85
    %v87 = vand.u32 %v53, 4294901760
    %88 = vmatpush.msra.mxu0 %v87
    %v89 = vand.u32 %v52, 4294901760
    %90 = vmatpush.msra.mxu0 %v89
    %v91 = vand.u32 %v51, 4294901760
    %92 = vmatpush.msra.mxu0 %v91
    %v93 = vand.u32 %v50, 4294901760
    %94 = vmatpush.msra.mxu0 %v93
    %v95 = vand.u32 %v49, 4294901760
    %96 = vmatpush.msra.mxu0 %v95
    %v97 = vand.u32 %v48, 4294901760
    %v98 = vsub.f32 %v48, %v97
    %v99 = vand.u32 %v98, 4294901760
    %v100 = vsub.f32 %v98, %v99
    %v101 = vand.u32 %v100, 4294901760
    %102 = vmatmul.f32.gmra.mxu0 %v101
    %v103 = vpop.f32.mrf.mxu0
    %v104 = vadd.f32 0.0, %v103
    %105 = vdwg.mxu0
    %v106 = vand.u32 %v64, 4294901760
    %v107 = vsub.f32 %v64, %v106
    %v108 = vand.u32 %v107, 4294901760
    %v109 = vsub.f32 %v107, %v108
    %v110 = vand.u32 %v109, 4294901760
    %111 = vmatpush.msra.mxu0 %v110
    %v112 = vand.u32 %v63, 4294901760
    %v113 = vsub.f32 %v63, %v112
    %v114 = vand.u32 %v113, 4294901760
    %v115 = vsub.f32 %v113, %v114
    %v116 = vand.u32 %v115, 4294901760
    %117 = vmatpush.msra.mxu0 %v116
    %v118 = vand.u32 %v62, 4294901760
    %v119 = vsub.f32 %v62, %v118
    %v120 = vand.u32 %v119, 4294901760
    %v121 = vsub.f32 %v119, %v120
    %v122 = vand.u32 %v121, 4294901760
    %123 = vmatpush.msra.mxu0 %v122
    %v124 = vand.u32 %v61, 4294901760
    %v125 = vsub.f32 %v61, %v124
    %v126 = vand.u32 %v125, 4294901760
    %v127 = vsub.f32 %v125, %v126
    %v128 = vand.u32 %v127, 4294901760
    %129 = vmatpush.msra.mxu0 %v128
    %v130 = vand.u32 %v60, 4294901760
    %v131 = vsub.f32 %v60, %v130
    %v132 = vand.u32 %v131, 4294901760
    %v133 = vsub.f32 %v131, %v132
    %v134 = vand.u32 %v133, 4294901760
    %135 = vmatpush.msra.mxu0 %v134
    %v136 = vand.u32 %v59, 4294901760
    %v137 = vsub.f32 %v59, %v136
    %v138 = vand.u32 %v137, 4294901760
    %v139 = vsub.f32 %v137, %v138
    %v140 = vand.u32 %v139, 4294901760
    %141 = vmatpush.msra.mxu0 %v140
    %v142 = vand.u32 %v58, 4294901760
    %v143 = vsub.f32 %v58, %v142
    %v144 = vand.u32 %v143, 4294901760
    %v145 = vsub.f32 %v143, %v144
    %v146 = vand.u32 %v145, 4294901760
    %147 = vmatpush.msra.mxu0 %v146
    %v148 = vand.u32 %v57, 4294901760
    %v149 = vsub.f32 %v57, %v148
    %v150 = vand.u32 %v149, 4294901760
    %v151 = vsub.f32 %v149, %v150
    %v152 = vand.u32 %v151, 4294901760
    %153 = vmatpush.msra.mxu0 %v152
    %v154 = vand.u32 %v56, 4294901760
    %v155 = vsub.f32 %v56, %v154
    %v156 = vand.u32 %v155, 4294901760
    %v157 = vsub.f32 %v155, %v156
    %v158 = vand.u32 %v157, 4294901760
    %159 = vmatpush.msra.mxu0 %v158
    %v160 = vand.u32 %v55, 4294901760
    %v161 = vsub.f32 %v55, %v160
    %v162 = vand.u32 %v161, 4294901760
    %v163 = vsub.f32 %v161, %v162
    %v164 = vand.u32 %v163, 4294901760
    %165 = vmatpush.msra.mxu0 %v164
    %v166 = vand.u32 %v54, 4294901760
    %v167 = vsub.f32 %v54, %v166
    %v168 = vand.u32 %v167, 4294901760
    %v169 = vsub.f32 %v167, %v168
    %v170 = vand.u32 %v169, 4294901760
    %171 = vmatpush.msra.mxu0 %v170
    %v172 = vand.u32 %v53, 4294901760
    %v173 = vsub.f32 %v53, %v172
    %v174 = vand.u32 %v173, 4294901760
    %v175 = vsub.f32 %v173, %v174
    %v176 = vand.u32 %v175, 4294901760
    %177 = vmatpush.msra.mxu0 %v176
    %v178 = vand.u32 %v52, 4294901760
    %v179 = vsub.f32 %v52, %v178
    %v180 = vand.u32 %v179, 4294901760
    %v181 = vsub.f32 %v179, %v180
    %v182 = vand.u32 %v181, 4294901760
    %183 = vmatpush.msra.mxu0 %v182
    %v184 = vand.u32 %v51, 4294901760
    %v185 = vsub.f32 %v51, %v184
    %v186 = vand.u32 %v185, 4294901760
    %v187 = vsub.f32 %v185, %v186
    %v188 = vand.u32 %v187, 4294901760
    %189 = vmatpush.msra.mxu0 %v188
    %v190 = vand.u32 %v50, 4294901760
    %v191 = vsub.f32 %v50, %v190
    %v192 = vand.u32 %v191, 4294901760
    %v193 = vsub.f32 %v191, %v192
    %v194 = vand.u32 %v193, 4294901760
    %195 = vmatpush.msra.mxu0 %v194
    %v196 = vand.u32 %v49, 4294901760
    %v197 = vsub.f32 %v49, %v196
    %v198 = vand.u32 %v197, 4294901760
    %v199 = vsub.f32 %v197, %v198
    %v200 = vand.u32 %v199, 4294901760
    %201 = vmatpush.msra.mxu0 %v200
    %v202 = vand.u32 %v48, 4294901760
    %203 = vmatmul.f32.gmra.mxu0 %v202
    %v204 = vpop.f32.mrf.mxu0
    %v205 = vadd.f32 %v104, %v204
    %206 = vdwg.mxu0
    %v207 = vand.u32 %v64, 4294901760
    %v208 = vsub.f32 %v64, %v207
    %209 = vmatpush.msra.mxu0 %v208
    %v210 = vand.u32 %v63, 4294901760
    %v211 = vsub.f32 %v63, %v210
    %212 = vmatpush.msra.mxu0 %v211
    %v213 = vand.u32 %v62, 4294901760
    %v214 = vsub.f32 %v62, %v213
    %215 = vmatpush.msra.mxu0 %v214
    %v216 = vand.u32 %v61, 4294901760
    %v217 = vsub.f32 %v61, %v216
    %218 = vmatpush.msra.mxu0 %v217
    %v219 = vand.u32 %v60, 4294901760
    %v220 = vsub.f32 %v60, %v219
    %221 = vmatpush.msra.mxu0 %v220
    %v222 = vand.u32 %v59, 4294901760
    %v223 = vsub.f32 %v59, %v222
    %224 = vmatpush.msra.mxu0 %v223
    %v225 = vand.u32 %v58, 4294901760
    %v226 = vsub.f32 %v58, %v225
    %227 = vmatpush.msra.mxu0 %v226
    %v228 = vand.u32 %v57, 4294901760
    %v229 = vsub.f32 %v57, %v228
    %230 = vmatpush.msra.mxu0 %v229
    %v231 = vand.u32 %v56, 4294901760
    %v232 = vsub.f32 %v56, %v231
    %233 = vmatpush.msra.mxu0 %v232
    %v234 = vand.u32 %v55, 4294901760
    %v235 = vsub.f32 %v55, %v234
    %236 = vmatpush.msra.mxu0 %v235
    %v237 = vand.u32 %v54, 4294901760
    %v238 = vsub.f32 %v54, %v237
    %239 = vmatpush.msra.mxu0 %v238
    %v240 = vand.u32 %v53, 4294901760
    %v241 = vsub.f32 %v53, %v240
    %242 = vmatpush.msra.mxu0 %v241
    %v243 = vand.u32 %v52, 4294901760
    %v244 = vsub.f32 %v52, %v243
    %245 = vmatpush.msra.mxu0 %v244
    %v246 = vand.u32 %v51, 4294901760
    %v247 = vsub.f32 %v51, %v246
    %248 = vmatpush.msra.mxu0 %v247
    %v249 = vand.u32 %v50, 4294901760
    %v250 = vsub.f32 %v50, %v249
    %251 = vmatpush.msra.mxu0 %v250
    %v252 = vand.u32 %v49, 4294901760
    %v253 = vsub.f32 %v49, %v252
    %254 = vmatpush.msra.mxu0 %v253
    %v255 = vand.u32 %v48, 4294901760
    %v256 = vsub.f32 %v48, %v255
    %257 = vmatmul.f32.gmra.mxu0 %v256
    %v258 = vpop.f32.mrf.mxu0
    %v259 = vadd.f32 %v205, %v258
    %260 = vdwg.mxu0
    %v261 = vand.u32 %v64, 4294901760
    %262 = vmatpush.msra.mxu0 %v261
    %v263 = vand.u32 %v63, 4294901760
    %264 = vmatpush.msra.mxu0 %v263
    %v265 = vand.u32 %v62, 4294901760
    %266 = vmatpush.msra.mxu0 %v265
    %v267 = vand.u32 %v61, 4294901760
    %268 = vmatpush.msra.mxu0 %v267
    %v269 = vand.u32 %v60, 4294901760
    %270 = vmatpush.msra.mxu0 %v269
    %v271 = vand.u32 %v59, 4294901760
    %272 = vmatpush.msra.mxu0 %v271
    %v273 = vand.u32 %v58, 4294901760
    %274 = vmatpush.msra.mxu0 %v273
    %v275 = vand.u32 %v57, 4294901760
    %276 = vmatpush.msra.mxu0 %v275
    %v277 = vand.u32 %v56, 4294901760
    %278 = vmatpush.msra.mxu0 %v277
    %v279 = vand.u32 %v55, 4294901760
    %280 = vmatpush.msra.mxu0 %v279
    %v281 = vand.u32 %v54, 4294901760
    %282 = vmatpush.msra.mxu0 %v281
    %v283 = vand.u32 %v53, 4294901760
    %284 = vmatpush.msra.mxu0 %v283
    %v285 = vand.u32 %v52, 4294901760
    %286 = vmatpush.msra.mxu0 %v285
    %v287 = vand.u32 %v51, 4294901760
    %288 = vmatpush.msra.mxu0 %v287
    %v289 = vand.u32 %v50, 4294901760
    %290 = vmatpush.msra.mxu0 %v289
    %v291 = vand.u32 %v49, 4294901760
    %292 = vmatpush.msra.mxu0 %v291
    %v293 = vand.u32 %v48, 4294901760
    %v294 = vsub.f32 %v48, %v293
    %v295 = vand.u32 %v294, 4294901760
    %296 = vmatmul.f32.gmra.mxu0 %v295
    %v297 = vpop.f32.mrf.mxu0
    %v298 = vadd.f32 %v259, %v297
    %299 = vdwg.mxu0
    %v300 = vand.u32 %v64, 4294901760
    %v301 = vsub.f32 %v64, %v300
    %v302 = vand.u32 %v301, 4294901760
    %303 = vmatpush.msra.mxu0 %v302
    %v304 = vand.u32 %v63, 4294901760
    %v305 = vsub.f32 %v63, %v304
    %v306 = vand.u32 %v305, 4294901760
    %307 = vmatpush.msra.mxu0 %v306
    %v308 = vand.u32 %v62, 4294901760
    %v309 = vsub.f32 %v62, %v308
    %v310 = vand.u32 %v309, 4294901760
    %311 = vmatpush.msra.mxu0 %v310
    %v312 = vand.u32 %v61, 4294901760
    %v313 = vsub.f32 %v61, %v312
    %v314 = vand.u32 %v313, 4294901760
    %315 = vmatpush.msra.mxu0 %v314
    %v316 = vand.u32 %v60, 4294901760
    %v317 = vsub.f32 %v60, %v316
    %v318 = vand.u32 %v317, 4294901760
    %319 = vmatpush.msra.mxu0 %v318
    %v320 = vand.u32 %v59, 4294901760
    %v321 = vsub.f32 %v59, %v320
    %v322 = vand.u32 %v321, 4294901760
    %323 = vmatpush.msra.mxu0 %v322
    %v324 = vand.u32 %v58, 4294901760
    %v325 = vsub.f32 %v58, %v324
    %v326 = vand.u32 %v325, 4294901760
    %327 = vmatpush.msra.mxu0 %v326
    %v328 = vand.u32 %v57, 4294901760
    %v329 = vsub.f32 %v57, %v328
    %v330 = vand.u32 %v329, 4294901760
    %331 = vmatpush.msra.mxu0 %v330
    %v332 = vand.u32 %v56, 4294901760
    %v333 = vsub.f32 %v56, %v332
    %v334 = vand.u32 %v333, 4294901760
    %335 = vmatpush.msra.mxu0 %v334
    %v336 = vand.u32 %v55, 4294901760
    %v337 = vsub.f32 %v55, %v336
    %v338 = vand.u32 %v337, 4294901760
    %339 = vmatpush.msra.mxu0 %v338
    %v340 = vand.u32 %v54, 4294901760
    %v341 = vsub.f32 %v54, %v340
    %v342 = vand.u32 %v341, 4294901760
    %343 = vmatpush.msra.mxu0 %v342
    %v344 = vand.u32 %v53, 4294901760
    %v345 = vsub.f32 %v53, %v344
    %v346 = vand.u32 %v345, 4294901760
    %347 = vmatpush.msra.mxu0 %v346
    %v348 = vand.u32 %v52, 4294901760
    %v349 = vsub.f32 %v52, %v348
    %v350 = vand.u32 %v349, 4294901760
    %351 = vmatpush.msra.mxu0 %v350
    %v352 = vand.u32 %v51, 4294901760
    %v353 = vsub.f32 %v51, %v352
    %v354 = vand.u32 %v353, 4294901760
    %355 = vmatpush.msra.mxu0 %v354
    %v356 = vand.u32 %v50, 4294901760
    %v357 = vsub.f32 %v50, %v356
    %v358 = vand.u32 %v357, 4294901760
    %359 = vmatpush.msra.mxu0 %v358
    %v360 = vand.u32 %v49, 4294901760
    %v361 = vsub.f32 %v49, %v360
    %v362 = vand.u32 %v361, 4294901760
    %363 = vmatpush.msra.mxu0 %v362
    %v364 = vand.u32 %v48, 4294901760
    %365 = vmatmul.f32.gmra.mxu0 %v364
    %v366 = vpop.f32.mrf.mxu0
    %v367 = vadd.f32 %v298, %v366
    %368 = vdwg.mxu0
    %v369 = vand.u32 %v64, 4294901760
    %370 = vmatpush.msra.mxu0 %v369
    %v371 = vand.u32 %v63, 4294901760
    %372 = vmatpush.msra.mxu0 %v371
    %v373 = vand.u32 %v62, 4294901760
    %374 = vmatpush.msra.mxu0 %v373
    %v375 = vand.u32 %v61, 4294901760
    %376 = vmatpush.msra.mxu0 %v375
    %v377 = vand.u32 %v60, 4294901760
    %378 = vmatpush.msra.mxu0 %v377
    %v379 = vand.u32 %v59, 4294901760
    %380 = vmatpush.msra.mxu0 %v379
    %v381 = vand.u32 %v58, 4294901760
    %382 = vmatpush.msra.mxu0 %v381
    %v383 = vand.u32 %v57, 4294901760
    %384 = vmatpush.msra.mxu0 %v383
    %v385 = vand.u32 %v56, 4294901760
    %386 = vmatpush.msra.mxu0 %v385
    %v387 = vand.u32 %v55, 4294901760
    %388 = vmatpush.msra.mxu0 %v387
    %v389 = vand.u32 %v54, 4294901760
    %390 = vmatpush.msra.mxu0 %v389
    %v391 = vand.u32 %v53, 4294901760
    %392 = vmatpush.msra.mxu0 %v391
    %v393 = vand.u32 %v52, 4294901760
    %394 = vmatpush.msra.mxu0 %v393
    %v395 = vand.u32 %v51, 4294901760
    %396 = vmatpush.msra.mxu0 %v395
    %v397 = vand.u32 %v50, 4294901760
    %398 = vmatpush.msra.mxu0 %v397
    %v399 = vand.u32 %v49, 4294901760
    %400 = vmatpush.msra.mxu0 %v399
    %v401 = vand.u32 %v48, 4294901760
    %402 = vmatmul.f32.gmra.mxu0 %v401
    %v403 = vpop.f32.mrf.mxu0
    %v404 = vadd.f32 %v367, %v403
    %405 = vdwg.mxu0
    %v406 = vsub.f32 %v48, %v404
    %v407 = vmul.f32 %v406, %v406
    %v408 = vand.u32 %v64, 4294901760
    %409 = vmatpush.msra.mxu0 %v408
    %v410 = vand.u32 %v63, 4294901760
    %411 = vmatpush.msra.mxu0 %v410
    %v412 = vand.u32 %v62, 4294901760
    %413 = vmatpush.msra.mxu0 %v412
    %v414 = vand.u32 %v61, 4294901760
    %415 = vmatpush.msra.mxu0 %v414
    %v416 = vand.u32 %v60, 4294901760
    %417 = vmatpush.msra.mxu0 %v416
    %v418 = vand.u32 %v59, 4294901760
    %419 = vmatpush.msra.mxu0 %v418
    %v420 = vand.u32 %v58, 4294901760
    %421 = vmatpush.msra.mxu0 %v420
    %v422 = vand.u32 %v57, 4294901760
    %423 = vmatpush.msra.mxu0 %v422
    %v424 = vand.u32 %v56, 4294901760
    %425 = vmatpush.msra.mxu0 %v424
    %v426 = vand.u32 %v55, 4294901760
    %427 = vmatpush.msra.mxu0 %v426
    %v428 = vand.u32 %v54, 4294901760
    %429 = vmatpush.msra.mxu0 %v428
    %v430 = vand.u32 %v53, 4294901760
    %431 = vmatpush.msra.mxu0 %v430
    %v432 = vand.u32 %v52, 4294901760
    %433 = vmatpush.msra.mxu0 %v432
    %v434 = vand.u32 %v51, 4294901760
    %435 = vmatpush.msra.mxu0 %v434
    %v436 = vand.u32 %v50, 4294901760
    %437 = vmatpush.msra.mxu0 %v436
    %v438 = vand.u32 %v49, 4294901760
    %439 = vmatpush.msra.mxu0 %v438
    %v440 = vand.u32 %v407, 4294901760
    %v441 = vsub.f32 %v407, %v440
    %v442 = vand.u32 %v441, 4294901760
    %v443 = vsub.f32 %v441, %v442
    %v444 = vand.u32 %v443, 4294901760
    %445 = vmatmul.f32.gmra.mxu0 %v444
    %v446 = vpop.f32.mrf.mxu0
    %v447 = vadd.f32 1e-05, %v446
    %448 = vdwg.mxu0
    %v449 = vand.u32 %v64, 4294901760
    %v450 = vsub.f32 %v64, %v449
    %v451 = vand.u32 %v450, 4294901760
    %v452 = vsub.f32 %v450, %v451
    %v453 = vand.u32 %v452, 4294901760
    %454 = vmatpush.msra.mxu0 %v453
    %v455 = vand.u32 %v63, 4294901760
    %v456 = vsub.f32 %v63, %v455
    %v457 = vand.u32 %v456, 4294901760
    %v458 = vsub.f32 %v456, %v457
    %v459 = vand.u32 %v458, 4294901760
    %460 = vmatpush.msra.mxu0 %v459
    %v461 = vand.u32 %v62, 4294901760
    %v462 = vsub.f32 %v62, %v461
    %v463 = vand.u32 %v462, 4294901760
    %v464 = vsub.f32 %v462, %v463
    %v465 = vand.u32 %v464, 4294901760
    %466 = vmatpush.msra.mxu0 %v465
    %v467 = vand.u32 %v61, 4294901760
    %v468 = vsub.f32 %v61, %v467
    %v469 = vand.u32 %v468, 4294901760
    %v470 = vsub.f32 %v468, %v469
    %v471 = vand.u32 %v470, 4294901760
    %472 = vmatpush.msra.mxu0 %v471
    %v473 = vand.u32 %v60, 4294901760
    %v474 = vsub.f32 %v60, %v473
    %v475 = vand.u32 %v474, 4294901760
    %v476 = vsub.f32 %v474, %v475
    %v477 = vand.u32 %v476, 4294901760
    %478 = vmatpush.msra.mxu0 %v477
    %v479 = vand.u32 %v59, 4294901760
    %v480 = vsub.f32 %v59, %v479
    %v481 = vand.u32 %v480, 4294901760
    %v482 = vsub.f32 %v480, %v481
    %v483 = vand.u32 %v482, 4294901760
    %484 = vmatpush.msra.mxu0 %v483
    %v485 = vand.u32 %v58, 4294901760
    %v486 = vsub.f32 %v58, %v485
    %v487 = vand.u32 %v486, 4294901760
    %v488 = vsub.f32 %v486, %v487
    %v489 = vand.u32 %v488, 4294901760
    %490 = vmatpush.msra.mxu0 %v489
    %v491 = vand.u32 %v57, 4294901760
    %v492 = vsub.f32 %v57, %v491
    %v493 = vand.u32 %v492, 4294901760
    %v494 = vsub.f32 %v492, %v493
    %v495 = vand.u32 %v494, 4294901760
    %496 = vmatpush.msra.mxu0 %v495
    %v497 = vand.u32 %v56, 4294901760
    %v498 = vsub.f32 %v56, %v497
    %v499 = vand.u32 %v498, 4294901760
    %v500 = vsub.f32 %v498, %v499
    %v501 = vand.u32 %v500, 4294901760
    %502 = vmatpush.msra.mxu0 %v501
    %v503 = vand.u32 %v55, 4294901760
    %v504 = vsub.f32 %v55, %v503
    %v505 = vand.u32 %v504, 4294901760
    %v506 = vsub.f32 %v504, %v505
    %v507 = vand.u32 %v506, 4294901760
    %508 = vmatpush.msra.mxu0 %v507
    %v509 = vand.u32 %v54, 4294901760
    %v510 = vsub.f32 %v54, %v509
    %v511 = vand.u32 %v510, 4294901760
    %v512 = vsub.f32 %v510, %v511
    %v513 = vand.u32 %v512, 4294901760
    %514 = vmatpush.msra.mxu0 %v513
    %v515 = vand.u32 %v53, 4294901760
    %v516 = vsub.f32 %v53, %v515
    %v517 = vand.u32 %v516, 4294901760
    %v518 = vsub.f32 %v516, %v517
    %v519 = vand.u32 %v518, 4294901760
    %520 = vmatpush.msra.mxu0 %v519
    %v521 = vand.u32 %v52, 4294901760
    %v522 = vsub.f32 %v52, %v521
    %v523 = vand.u32 %v522, 4294901760
    %v524 = vsub.f32 %v522, %v523
    %v525 = vand.u32 %v524, 4294901760
    %526 = vmatpush.msra.mxu0 %v525
    %v527 = vand.u32 %v51, 4294901760
    %v528 = vsub.f32 %v51, %v527
    %v529 = vand.u32 %v528, 4294901760
    %v530 = vsub.f32 %v528, %v529
    %v531 = vand.u32 %v530, 4294901760
    %532 = vmatpush.msra.mxu0 %v531
    %v533 = vand.u32 %v50, 4294901760
    %v534 = vsub.f32 %v50, %v533
    %v535 = vand.u32 %v534, 4294901760
    %v536 = vsub.f32 %v534, %v535
    %v537 = vand.u32 %v536, 4294901760
    %538 = vmatpush.msra.mxu0 %v537
    %v539 = vand.u32 %v49, 4294901760
    %v540 = vsub.f32 %v49, %v539
    %v541 = vand.u32 %v540, 4294901760
    %v542 = vsub.f32 %v540, %v541
    %v543 = vand.u32 %v542, 4294901760
    %544 = vmatpush.msra.mxu0 %v543
    %v545 = vand.u32 %v407, 4294901760
    %546 = vmatmul.f32.gmra.mxu0 %v545
    %v547 = vpop.f32.mrf.mxu0
    %v548 = vadd.f32 %v447, %v547
    %549 = vdwg.mxu0
    %v550 = vand.u32 %v64, 4294901760
    %v551 = vsub.f32 %v64, %v550
    %552 = vmatpush.msra.mxu0 %v551
    %v553 = vand.u32 %v63, 4294901760
    %v554 = vsub.f32 %v63, %v553
    %555 = vmatpush.msra.mxu0 %v554
    %v556 = vand.u32 %v62, 4294901760
    %v557 = vsub.f32 %v62, %v556
    %558 = vmatpush.msra.mxu0 %v557
    %v559 = vand.u32 %v61, 4294901760
    %v560 = vsub.f32 %v61, %v559
    %561 = vmatpush.msra.mxu0 %v560
    %v562 = vand.u32 %v60, 4294901760
    %v563 = vsub.f32 %v60, %v562
    %564 = vmatpush.msra.mxu0 %v563
    %v565 = vand.u32 %v59, 4294901760
    %v566 = vsub.f32 %v59, %v565
    %567 = vmatpush.msra.mxu0 %v566
    %v568 = vand.u32 %v58, 4294901760
    %v569 = vsub.f32 %v58, %v568
    %570 = vmatpush.msra.mxu0 %v569
    %v571 = vand.u32 %v57, 4294901760
    %v572 = vsub.f32 %v57, %v571
    %573 = vmatpush.msra.mxu0 %v572
    %v574 = vand.u32 %v56, 4294901760
    %v575 = vsub.f32 %v56, %v574
    %576 = vmatpush.msra.mxu0 %v575
    %v577 = vand.u32 %v55, 4294901760
    %v578 = vsub.f32 %v55, %v577
    %579 = vmatpush.msra.mxu0 %v578
    %v580 = vand.u32 %v54, 4294901760
    %v581 = vsub.f32 %v54, %v580
    %582 = vmatpush.msra.mxu0 %v581
    %v583 = vand.u32 %v53, 4294901760
    %v584 = vsub.f32 %v53, %v583
    %585 = vmatpush.msra.mxu0 %v584
    %v586 = vand.u32 %v52, 4294901760
    %v587 = vsub.f32 %v52, %v586
    %588 = vmatpush.msra.mxu0 %v587
    %v589 = vand.u32 %v51, 4294901760
    %v590 = vsub.f32 %v51, %v589
    %591 = vmatpush.msra.mxu0 %v590
    %v592 = vand.u32 %v50, 4294901760
    %v593 = vsub.f32 %v50, %v592
    %594 = vmatpush.msra.mxu0 %v593
    %v595 = vand.u32 %v49, 4294901760
    %v596 = vsub.f32 %v49, %v595
    %597 = vmatpush.msra.mxu0 %v596
    %v598 = vand.u32 %v407, 4294901760
    %v599 = vsub.f32 %v407, %v598
    %600 = vmatmul.f32.gmra.mxu0 %v599
    %v601 = vpop.f32.mrf.mxu0
    %v602 = vadd.f32 %v548, %v601
    %603 = vdwg.mxu0
    %v604 = vand.u32 %v64, 4294901760
    %605 = vmatpush.msra.mxu0 %v604
    %v606 = vand.u32 %v63, 4294901760
    %607 = vmatpush.msra.mxu0 %v606
    %v608 = vand.u32 %v62, 4294901760
    %609 = vmatpush.msra.mxu0 %v608
    %v610 = vand.u32 %v61, 4294901760
    %611 = vmatpush.msra.mxu0 %v610
    %v612 = vand.u32 %v60, 4294901760
    %613 = vmatpush.msra.mxu0 %v612
    %v614 = vand.u32 %v59, 4294901760
    %615 = vmatpush.msra.mxu0 %v614
    %v616 = vand.u32 %v58, 4294901760
    %617 = vmatpush.msra.mxu0 %v616
    %v618 = vand.u32 %v57, 4294901760
    %619 = vmatpush.msra.mxu0 %v618
    %v620 = vand.u32 %v56, 4294901760
    %621 = vmatpush.msra.mxu0 %v620
    %v622 = vand.u32 %v55, 4294901760
    %623 = vmatpush.msra.mxu0 %v622
    %v624 = vand.u32 %v54, 4294901760
    %625 = vmatpush.msra.mxu0 %v624
    %v626 = vand.u32 %v53, 4294901760
    %627 = vmatpush.msra.mxu0 %v626
    %v628 = vand.u32 %v52, 4294901760
    %629 = vmatpush.msra.mxu0 %v628
    %v630 = vand.u32 %v51, 4294901760
    %631 = vmatpush.msra.mxu0 %v630
    %v632 = vand.u32 %v50, 4294901760
    %633 = vmatpush.msra.mxu0 %v632
    %v634 = vand.u32 %v49, 4294901760
    %635 = vmatpush.msra.mxu0 %v634
    %v636 = vand.u32 %v407, 4294901760
    %v637 = vsub.f32 %v407, %v636
    %v638 = vand.u32 %v637, 4294901760
    %639 = vmatmul.f32.gmra.mxu0 %v638
    %v640 = vpop.f32.mrf.mxu0
    %v641 = vadd.f32 %v602, %v640
    %642 = vdwg.mxu0
    %v643 = vand.u32 %v64, 4294901760
    %v644 = vsub.f32 %v64, %v643
    %v645 = vand.u32 %v644, 4294901760
    %646 = vmatpush.msra.mxu0 %v645
    %v647 = vand.u32 %v63, 4294901760
    %v648 = vsub.f32 %v63, %v647
    %v649 = vand.u32 %v648, 4294901760
    %650 = vmatpush.msra.mxu0 %v649
    %v651 = vand.u32 %v62, 4294901760
    %v652 = vsub.f32 %v62, %v651
    %v653 = vand.u32 %v652, 4294901760
    %654 = vmatpush.msra.mxu0 %v653
    %v655 = vand.u32 %v61, 4294901760
    %v656 = vsub.f32 %v61, %v655
    %v657 = vand.u32 %v656, 4294901760
    %658 = vmatpush.msra.mxu0 %v657
    %v659 = vand.u32 %v60, 4294901760
    %v660 = vsub.f32 %v60, %v659
    %v661 = vand.u32 %v660, 4294901760
    %662 = vmatpush.msra.mxu0 %v661
    %v663 = vand.u32 %v59, 4294901760
    %v664 = vsub.f32 %v59, %v663
    %v665 = vand.u32 %v664, 4294901760
    %666 = vmatpush.msra.mxu0 %v665
    %v667 = vand.u32 %v58, 4294901760
    %v668 = vsub.f32 %v58, %v667
    %v669 = vand.u32 %v668, 4294901760
    %670 = vmatpush.msra.mxu0 %v669
    %v671 = vand.u32 %v57, 4294901760
    %v672 = vsub.f32 %v57, %v671
    %v673 = vand.u32 %v672, 4294901760
    %674 = vmatpush.msra.mxu0 %v673
    %v675 = vand.u32 %v56, 4294901760
    %v676 = vsub.f32 %v56, %v675
    %v677 = vand.u32 %v676, 4294901760
    %678 = vmatpush.msra.mxu0 %v677
    %v679 = vand.u32 %v55, 4294901760
    %v680 = vsub.f32 %v55, %v679
    %v681 = vand.u32 %v680, 4294901760
    %682 = vmatpush.msra.mxu0 %v681
    %v683 = vand.u32 %v54, 4294901760
    %v684 = vsub.f32 %v54, %v683
    %v685 = vand.u32 %v684, 4294901760
    %686 = vmatpush.msra.mxu0 %v685
    %v687 = vand.u32 %v53, 4294901760
    %v688 = vsub.f32 %v53, %v687
    %v689 = vand.u32 %v688, 4294901760
    %690 = vmatpush.msra.mxu0 %v689
    %v691 = vand.u32 %v52, 4294901760
    %v692 = vsub.f32 %v52, %v691
    %v693 = vand.u32 %v692, 4294901760
    %694 = vmatpush.msra.mxu0 %v693
    %v695 = vand.u32 %v51, 4294901760
    %v696 = vsub.f32 %v51, %v695
    %v697 = vand.u32 %v696, 4294901760
    %698 = vmatpush.msra.mxu0 %v697
    %v699 = vand.u32 %v50, 4294901760
    %v700 = vsub.f32 %v50, %v699
    %v701 = vand.u32 %v700, 4294901760
    %702 = vmatpush.msra.mxu0 %v701
    %v703 = vand.u32 %v49, 4294901760
    %v704 = vsub.f32 %v49, %v703
    %v705 = vand.u32 %v704, 4294901760
    %706 = vmatpush.msra.mxu0 %v705
    %v707 = vand.u32 %v407, 4294901760
    %708 = vmatmul.f32.gmra.mxu0 %v707
    %v709 = vpop.f32.mrf.mxu0
    %v710 = vadd.f32 %v641, %v709
    %711 = vdwg.mxu0
    %v712 = vand.u32 %v64, 4294901760
    %713 = vmatpush.msra.mxu0 %v712
    %v714 = vand.u32 %v63, 4294901760
    %715 = vmatpush.msra.mxu0 %v714
    %v716 = vand.u32 %v62, 4294901760
    %717 = vmatpush.msra.mxu0 %v716
    %v718 = vand.u32 %v61, 4294901760
    %719 = vmatpush.msra.mxu0 %v718
    %v720 = vand.u32 %v60, 4294901760
    %721 = vmatpush.msra.mxu0 %v720
    %v722 = vand.u32 %v59, 4294901760
    %723 = vmatpush.msra.mxu0 %v722
    %v724 = vand.u32 %v58, 4294901760
    %725 = vmatpush.msra.mxu0 %v724
    %v726 = vand.u32 %v57, 4294901760
    %727 = vmatpush.msra.mxu0 %v726
    %v728 = vand.u32 %v56, 4294901760
    %729 = vmatpush.msra.mxu0 %v728
    %v730 = vand.u32 %v55, 4294901760
    %731 = vmatpush.msra.mxu0 %v730
    %v732 = vand.u32 %v54, 4294901760
    %733 = vmatpush.msra.mxu0 %v732
    %v734 = vand.u32 %v53, 4294901760
    %735 = vmatpush.msra.mxu0 %v734
    %v736 = vand.u32 %v52, 4294901760
    %737 = vmatpush.msra.mxu0 %v736
    %v738 = vand.u32 %v51, 4294901760
    %739 = vmatpush.msra.mxu0 %v738
    %v740 = vand.u32 %v50, 4294901760
    %741 = vmatpush.msra.mxu0 %v740
    %v742 = vand.u32 %v49, 4294901760
    %743 = vmatpush.msra.mxu0 %v742
    %v744 = vand.u32 %v407, 4294901760
    %745 = vmatmul.f32.gmra.mxu0 %v744
    %v746 = vpop.f32.mrf.mxu0
    %v747 = vadd.f32 %v710, %v746
    %748 = vdwg.mxu0
    %v749 = vrsqrt.pop %v747
    %v750 = vmul.f32 %v749, %v747
    %v751 = vmul.f32 %v750, %v749
    %v752 = vmul.f32 0.5, %v751
    %v753 = vsub.f32 1.5, %v752
    %v754 = vmul.f32 %v749, %v753
    %vm755 = vweird.f32 %v747
    %vm756 = vweird.f32 %v749
    %vm757 = vmor %vm755, %vm756
    %v758 = vsel %vm757, %v749, %v754
    %v759 = vld [vmem:[%s2] sm:$0x1]
    %v760 = vld [vmem:[%s3] sm:$0x1]
    %v761 = vmul.f32 %v406, %v758
    %v763 = vperm.slane %v759, 0
    %v765 = vmul.f32 %v761, %v763
    %v767 = vperm.slane %v760, 0
    %v769 = vadd.f32 %v765, %v767
    %770 = vst [vmem:[#allocation7] sm:$0xf] %v769
    // Predicated region
    $region26: #{tpu_custom_call.1} parent=1 // pred_check
      _
    $region27: #{tpu_custom_call.1} parent=1 // pred_check_branch
      %772 = sbr.rel (0) target = $region29
    $region28: #{tpu_custom_call.1} parent=1 // pred_region
      %774 = vsyncadd [#allocation4], 0
      %s776 = sshll.u32 [#allocation7], 4
      %s777 = int_to_ptr.vmem [resolvable:$true] %s776
      %s778 = sshll.u32 %s4, 4
      %s779 = int_to_ptr.hbm [resolvable:$true] %s778
      %781 = dma.vmem_to_hbm [thread:$0]  %s777, 64, %s779, [#allocation4]
    $region29: #{tpu_custom_call.1} parent=1 // pred_fallthru
      _
    // Predicated region
    $region30: #{tpu_custom_call.1} parent=1 // pred_check
      _
    $region31: #{tpu_custom_call.1} parent=1 // pred_check_branch
      %783 = sbr.rel (0) target = $region33
    $region32: #{tpu_custom_call.1} parent=1 // pred_region
      %785 = dma.done [#allocation4], 64
    $region33: #{tpu_custom_call.1} parent=1 // pred_fallthru
      _
    %786 = vsyncpa [#allocation3], 1
    %787 = vsyncpa [#allocation6], 1
    %788 = vsyncpa [#allocation4], 1

</llo_original>
